<compile_context>
chip_gen: v5e
topology: v5e:2x2
jax: 0.10.0
libtpu: 0.0.40
codegen_flags: <defaults>
</compile_context>

<pallas_src>
import functools

import jax
import jax.numpy as jnp
import numpy as np
from jax.experimental import pallas as pl
from jax.experimental.pallas import tpu as pltpu


def _round_up(x, m):
    return (x + m - 1) // m * m


def _cdiv(a, b):
    return -(-a // b)


def _per_row_ce(logits, tgt_col):
    """Per-row cross entropy: logsumexp(logits_i) - logits_i[tgt_i].

    logits:  (TB, C) float32
    tgt_col: (TB, 1) int32
    returns: (TB, 1) float32
    """
    tb, c = logits.shape
    m = jnp.max(logits, axis=-1, keepdims=True)                                # (TB, 1)
    lse = m + jnp.log(jnp.sum(jnp.exp(logits - m), axis=-1, keepdims=True))    # (TB, 1)
    # gather logits[i, tgt[i]] via one-hot select (no dynamic gather on TPU vregs)
    col = jax.lax.broadcasted_iota(jnp.int32, (tb, c), 1)                      # (TB, C)
    picked = jnp.sum(jnp.where(col == tgt_col, logits, 0.0),
                     axis=-1, keepdims=True)                                   # (TB, 1)
    return lse - picked


def _multitask_ce_kernel(tone_ref, tone_tgt_ref, pin_ref, pin_tgt_ref,
                         out_ref, *, batch, inv_batch):
    i = pl.program_id(0)
    tb = tone_ref.shape[0]

    # Upcast in-kernel (keeps HBM reads at the input dtype).
    tone = tone_ref[...].astype(jnp.float32)
    pin = pin_ref[...].astype(jnp.float32)

    per_row = (_per_row_ce(tone, tone_tgt_ref[...])
               + _per_row_ce(pin, pin_tgt_ref[...]))                           # (TB, 1)

    # Mask rows beyond the true batch (edge-block garbage rows contribute 0;
    # jnp.where selects, so NaN/inf in masked rows is discarded).
    row = jax.lax.broadcasted_iota(jnp.int32, (tb, 1), 0)
    per_row = jnp.where(i * tb + row < batch, per_row, 0.0)

    total = jnp.sum(per_row, axis=0, keepdims=True) * inv_batch                # (1, 1)
    out_ref[...] = total.reshape(1, 1, 1)


def _hw_config():
    """Returns (vmem_limit_bytes or None, input-tile VMEM budget in bytes)."""
    kind = ""
    try:
        kind = jax.devices()[0].device_kind.lower()
    except Exception:
        pass
    if "v7" in kind:
        # 64 MiB VMEM per TC: cap the raised limit well below physical.
        return 44 << 20, 28 << 20
    if "v6" in kind:
        # 128 MiB physical, 32 MiB scoped default.
        return 64 << 20, 44 << 20
    if "v5" in kind:
        # 16 MiB scoped default on v5e; raise it but stay conservative.
        return 32 << 20, 20 << 20
    # Unknown chip: stay within the smallest scoped default, don't force a limit.
    return None, 10 << 20


def _pick_batch_tile(batch, c_tone, c_pin, elt_bytes, budget_bytes):
    """Largest batch tile (multiple of 8, <= 4096, <= batch) whose
    double-buffered input tiles + f32 upcast temporaries fit the VMEM budget."""
    if batch < 8:
        return batch  # full-dim block satisfies the (8,128) rule by equality
    lane = lambda c: _round_up(c, 128)
    in_row = (lane(c_tone) + lane(c_pin)) * elt_bytes + 2 * 128 * 4  # logits + int32 tgts
    tmp_row = 6 * (lane(c_tone) + lane(c_pin)) * 4                   # f32 upcast / exp temps
    row_bytes = 2 * in_row + tmp_row                                 # 2x: double-buffering
    cap = max(8, (budget_bytes // row_bytes) // 8 * 8)
    tb = min(4096, cap, batch // 8 * 8)
    return max(8, tb)


def multitask_classification_loss(tone_out, tone_tgt, pinyin_out, pinyin_tgt):
    """tone_out: (B, C_tone) float; tone_tgt: (B,) int;
       pinyin_out: (B, C_pinyin) float; pinyin_tgt: (B,) int.
       Returns scalar float32 loss."""
    b, c_tone = tone_out.shape
    b2, c_pin = pinyin_out.shape
    assert b == b2, "batch mismatch between tone and pinyin heads"

    elt_bytes = max(jnp.dtype(tone_out.dtype).itemsize,
                    jnp.dtype(pinyin_out.dtype).itemsize)

    vmem_limit, budget = _hw_config()
    tb = _pick_batch_tile(b, c_tone, c_pin, elt_bytes, budget)
    n_tiles = _cdiv(b, tb)

    # Only the tiny (B,) -> (B,1) int32 target columns get copied; the logits
    # tensors are consumed in place (no wrapper-side pad / transpose).
    tone_tgt_col = tone_tgt.astype(jnp.int32).reshape(-1, 1)
    pin_tgt_col = pinyin_tgt.astype(jnp.int32).reshape(-1, 1)

    kernel = functools.partial(_multitask_ce_kernel, batch=b, inv_batch=1.0 / b)

    cp_kwargs = dict(dimension_semantics=("parallel",))
    if vmem_limit is not None:
        cp_kwargs["vmem_limit_bytes"] = int(vmem_limit)

    tile_map = lambda i: (i, 0)

    partials = pl.pallas_call(
        kernel,
        out_shape=jax.ShapeDtypeStruct((n_tiles, 1, 1), jnp.float32),
        grid_spec=pltpu.PrefetchScalarGridSpec(
            num_scalar_prefetch=0,
            grid=(n_tiles,),
            in_specs=[
                pl.BlockSpec((tb, c_tone), tile_map),
                pl.BlockSpec((tb, 1), tile_map),
                pl.BlockSpec((tb, c_pin), tile_map),
                pl.BlockSpec((tb, 1), tile_map),
            ],
            out_specs=pl.BlockSpec((1, 1, 1), lambda i: (i, 0, 0)),
        ),
        compiler_params=pltpu.CompilerParams(**cp_kwargs),
    )(tone_out, tone_tgt_col, pinyin_out, pin_tgt_col)

    return jnp.sum(partials)


def _reference_loss(tone_out, tone_tgt, pinyin_out, pinyin_tgt):
    def ce(logits, tgt):
        logp = jax.nn.log_softmax(logits.astype(jnp.float32), axis=-1)
        nll = -jnp.take_along_axis(logp, tgt[:, None].astype(jnp.int32), axis=-1)
        return jnp.mean(nll)
    return ce(tone_out, tone_tgt) + ce(pinyin_out, pinyin_tgt)


if __name__ == "__main__":
    key = jax.random.PRNGKey(0)
    k1, k2, k3, k4 = jax.random.split(key, 4)

    B = 8
    N_TONES = 5
    N_PINYIN = 60

    tone_out = jax.random.normal(k1, (B, N_TONES), dtype=jnp.float32)
    pinyin_out = jax.random.normal(k2, (B, N_PINYIN), dtype=jnp.float32)
    tone_tgt = jax.random.randint(k3, (B,), 0, N_TONES, dtype=jnp.int32)
    pinyin_tgt = jax.random.randint(k4, (B,), 0, N_PINYIN, dtype=jnp.int32)

    loss = jax.block_until_ready(
        multitask_classification_loss(tone_out, tone_tgt, pinyin_out, pinyin_tgt))

    ref = jax.block_until_ready(
        _reference_loss(tone_out, tone_tgt, pinyin_out, pinyin_tgt))

    assert np.allclose(np.asarray(loss), np.asarray(ref), rtol=1e-5, atol=1e-5), \
        f"mismatch: kernel={loss}, ref={ref}"
    print("KERNEL_OK")
</pallas_src>

<mosaic_0001>
module attributes {stable_mosaic.version = 11 : i64} {
  func.func @_multitask_ce_kernel(%arg0: i32, %arg1: memref<8x5xf32, #tpu.memory_space<vmem>>, %arg2: memref<8x1xi32, #tpu.memory_space<vmem>>, %arg3: memref<8x60xf32, #tpu.memory_space<vmem>>, %arg4: memref<8x1xi32, #tpu.memory_space<vmem>>, %arg5: memref<1x1x1xf32, #tpu.memory_space<vmem>>) attributes {dimension_semantics = [#tpu.dimension_semantics<parallel>], iteration_bounds = array<i64: 1>, scalar_prefetch = 0 : i64, scratch_operands = 0 : i64, tpu.core_type = #tpu.core_type<tc>, window_params = [{transform_indices = @transform_0, window_bounds = array<i64: 8, 5>}, {transform_indices = @transform_1, window_bounds = array<i64: 8, 1>}, {transform_indices = @transform_2, window_bounds = array<i64: 8, 60>}, {transform_indices = @transform_3, window_bounds = array<i64: 8, 1>}, {transform_indices = @transform_4, window_bounds = array<i64: 1, 1, 1>}]} {
    %c0 = arith.constant 0 : index
    %c0_0 = arith.constant 0 : index
    %0 = vector.load %arg1[%c0, %c0_0] : memref<8x5xf32, #tpu.memory_space<vmem>>, vector<8x5xf32>
    %c0_1 = arith.constant 0 : index
    %c0_2 = arith.constant 0 : index
    %1 = vector.load %arg3[%c0_1, %c0_2] : memref<8x60xf32, #tpu.memory_space<vmem>>, vector<8x60xf32>
    %c0_3 = arith.constant 0 : index
    %c0_4 = arith.constant 0 : index
    %2 = vector.load %arg2[%c0_3, %c0_4] : memref<8x1xi32, #tpu.memory_space<vmem>>, vector<8x1xi32>
    %cst = arith.constant dense<0xFF800000> : vector<8xf32>
    %3 = vector.multi_reduction <maximumf>, %0, %cst [1] : vector<8x5xf32> to vector<8xf32>
    %4 = vector.shape_cast %3 : vector<8xf32> to vector<8x1xf32>
    %5 = vector.broadcast %4 : vector<8x1xf32> to vector<8x5xf32>
    %6 = arith.subf %0, %5 : vector<8x5xf32>
    %7 = math.exp %6 : vector<8x5xf32>
    %cst_5 = arith.constant dense<0.000000e+00> : vector<8xf32>
    %8 = vector.multi_reduction <add>, %7, %cst_5 [1] : vector<8x5xf32> to vector<8xf32>
    %9 = vector.shape_cast %8 : vector<8xf32> to vector<8x1xf32>
    %10 = math.log %9 : vector<8x1xf32>
    %11 = arith.addf %4, %10 : vector<8x1xf32>
    %12 = tpu.iota {dimensions = array<i32: 1>} : vector<8x5xi32>
    %13 = vector.broadcast %2 : vector<8x1xi32> to vector<8x5xi32>
    %14 = arith.cmpi eq, %12, %13 : vector<8x5xi32>
    %cst_6 = arith.constant 0.000000e+00 : f32
    %15 = vector.broadcast %cst_6 : f32 to vector<8x5xf32>
    %16 = arith.select %14, %0, %15 : vector<8x5xi1>, vector<8x5xf32>
    %cst_7 = arith.constant dense<0.000000e+00> : vector<8xf32>
    %17 = vector.multi_reduction <add>, %16, %cst_7 [1] : vector<8x5xf32> to vector<8xf32>
    %18 = vector.shape_cast %17 : vector<8xf32> to vector<8x1xf32>
    %19 = arith.subf %11, %18 : vector<8x1xf32>
    %c0_8 = arith.constant 0 : index
    %c0_9 = arith.constant 0 : index
    %20 = vector.load %arg4[%c0_8, %c0_9] : memref<8x1xi32, #tpu.memory_space<vmem>>, vector<8x1xi32>
    %cst_10 = arith.constant dense<0xFF800000> : vector<8xf32>
    %21 = vector.multi_reduction <maximumf>, %1, %cst_10 [1] : vector<8x60xf32> to vector<8xf32>
    %22 = vector.shape_cast %21 : vector<8xf32> to vector<8x1xf32>
    %23 = vector.broadcast %22 : vector<8x1xf32> to vector<8x60xf32>
    %24 = arith.subf %1, %23 : vector<8x60xf32>
    %25 = math.exp %24 : vector<8x60xf32>
    %cst_11 = arith.constant dense<0.000000e+00> : vector<8xf32>
    %26 = vector.multi_reduction <add>, %25, %cst_11 [1] : vector<8x60xf32> to vector<8xf32>
    %27 = vector.shape_cast %26 : vector<8xf32> to vector<8x1xf32>
    %28 = math.log %27 : vector<8x1xf32>
    %29 = arith.addf %22, %28 : vector<8x1xf32>
    %30 = tpu.iota {dimensions = array<i32: 1>} : vector<8x60xi32>
    %31 = vector.broadcast %20 : vector<8x1xi32> to vector<8x60xi32>
    %32 = arith.cmpi eq, %30, %31 : vector<8x60xi32>
    %cst_12 = arith.constant 0.000000e+00 : f32
    %33 = vector.broadcast %cst_12 : f32 to vector<8x60xf32>
    %34 = arith.select %32, %1, %33 : vector<8x60xi1>, vector<8x60xf32>
    %cst_13 = arith.constant dense<0.000000e+00> : vector<8xf32>
    %35 = vector.multi_reduction <add>, %34, %cst_13 [1] : vector<8x60xf32> to vector<8xf32>
    %36 = vector.shape_cast %35 : vector<8xf32> to vector<8x1xf32>
    %37 = arith.subf %29, %36 : vector<8x1xf32>
    %38 = arith.addf %19, %37 : vector<8x1xf32>
    %39 = tpu.iota {dimensions = array<i32: 0>} : vector<8x1xi32>
    %c8_i32 = arith.constant 8 : i32
    %40 = arith.muli %arg0, %c8_i32 : i32
    %41 = vector.broadcast %40 : i32 to vector<8x1xi32>
    %42 = arith.addi %41, %39 : vector<8x1xi32>
    %c8_i32_14 = arith.constant 8 : i32
    %43 = vector.broadcast %c8_i32_14 : i32 to vector<8x1xi32>
    %44 = arith.cmpi slt, %42, %43 : vector<8x1xi32>
    %cst_15 = arith.constant 0.000000e+00 : f32
    %45 = vector.broadcast %cst_15 : f32 to vector<8x1xf32>
    %46 = arith.select %44, %38, %45 : vector<8x1xi1>, vector<8x1xf32>
    %cst_16 = arith.constant dense<0.000000e+00> : vector<1xf32>
    %47 = vector.multi_reduction <add>, %46, %cst_16 [0] : vector<8x1xf32> to vector<1xf32>
    %48 = vector.shape_cast %47 : vector<1xf32> to vector<1x1xf32>
    %cst_17 = arith.constant 1.250000e-01 : f32
    %49 = vector.broadcast %cst_17 : f32 to vector<1x1xf32>
    %50 = arith.mulf %48, %49 : vector<1x1xf32>
    %51 = vector.shape_cast %50 : vector<1x1xf32> to vector<1x1x1xf32>
    %c0_18 = arith.constant 0 : index
    %c0_19 = arith.constant 0 : index
    %c0_20 = arith.constant 0 : index
    %52 = vector.load %arg5[%c0_18, %c0_19, %c0_20] : memref<1x1x1xf32, #tpu.memory_space<vmem>>, vector<1x1x1xf32>
    tpu.vector_store %arg5[%c0_18, %c0_19, %c0_20], %51 {strides = array<i32>} : memref<1x1x1xf32, #tpu.memory_space<vmem>>, vector<1x1x1xf32>,
    return
  }
  func.func @transform_0(%arg0: i32) -> (i32, i32) {
    %c0_i32 = arith.constant 0 : i32
    %c0_i32_0 = arith.constant 0 : i32
    return %arg0, %c0_i32 : i32, i32
  }
  func.func @transform_1(%arg0: i32) -> (i32, i32) {
    %c0_i32 = arith.constant 0 : i32
    %c0_i32_0 = arith.constant 0 : i32
    return %arg0, %c0_i32 : i32, i32
  }
  func.func @transform_2(%arg0: i32) -> (i32, i32) {
    %c0_i32 = arith.constant 0 : i32
    %c0_i32_0 = arith.constant 0 : i32
    return %arg0, %c0_i32 : i32, i32
  }
  func.func @transform_3(%arg0: i32) -> (i32, i32) {
    %c0_i32 = arith.constant 0 : i32
    %c0_i32_0 = arith.constant 0 : i32
    return %arg0, %c0_i32 : i32, i32
  }
  func.func @transform_4(%arg0: i32) -> (i32, i32, i32) {
    %c0_i32 = arith.constant 0 : i32
    %c0_i32_0 = arith.constant 0 : i32
    %c0_i32_1 = arith.constant 0 : i32
    return %arg0, %c0_i32, %c0_i32_0 : i32, i32, i32
  }
}

</mosaic_0001>

<llo_original>
// kernel: tpu_custom_call.1
$region0: #{tpu_custom_call.1}
  #allocation0 [shape = 'u32[]', space=smem, size = 0x4, offset = 0x4, fixed_abs, tag = 'smem constant byte address 0x4 - core index']
  #allocation1 [shape = 'u32[72,128]{1,0:T(1,128)}', space=vmem, size = 0x9000, scoped, tag = 'internal scratch']
  %s0 = inlined_call_operand.vmem [shape: f32[8,5], index: 0, kind: input, shape index: {}]
  %s1 = inlined_call_operand.vmem [shape: s32[8,1], index: 1, kind: input, shape index: {}]
  %s2 = inlined_call_operand.vmem [shape: f32[8,60], index: 2, kind: input, shape index: {}]
  %s3 = inlined_call_operand.vmem [shape: s32[8,1], index: 3, kind: input, shape index: {}]
  %s4 = inlined_call_operand.hbm [shape: f32[1,1,1], index: 4, kind: output, shape index: {}]
  %s5 = sld [smem:[#allocation0]]
  $region26: #{tpu_custom_call.1} parent=0
    _
  %s7 = ssub.s32 1, %s5
  %s8 = scalar_select 0, %s7, %s5
  $region1: #{tpu_custom_call.1} parent=0
    #allocation2 [shape = 'u8[512]{0}', space=vmem, size = 0x400, scoped, tag = 'output window, operand 0, single buffered']
    #allocation3 [shape = 's32[1]{0}', space=sflag, size = 0x4, scoped, tag = 'scoped memory for tpu_custom_call.1']
    %9 = vsyncpa [#allocation3], 0
    // Predicated region
    $region2: #{tpu_custom_call.1} parent=1 // pred_check
      _
    $region3: #{tpu_custom_call.1} parent=1 // pred_check_branch
      %11 = sbr.rel (0) target = $region5
    $region4: #{tpu_custom_call.1} parent=1 // pred_region
      _
    $region5: #{tpu_custom_call.1} parent=1 // pred_fallthru
      _
    // Predicated region
    $region6: #{tpu_custom_call.1} parent=1 // pred_check
      _
    $region7: #{tpu_custom_call.1} parent=1 // pred_check_branch
      %13 = sbr.rel (0) target = $region9
    $region8: #{tpu_custom_call.1} parent=1 // pred_region
      _
    $region9: #{tpu_custom_call.1} parent=1 // pred_fallthru
      _
    // Predicated region
    $region10: #{tpu_custom_call.1} parent=1 // pred_check
      _
    $region11: #{tpu_custom_call.1} parent=1 // pred_check_branch
      %15 = sbr.rel (0) target = $region13
    $region12: #{tpu_custom_call.1} parent=1 // pred_region
      _
    $region13: #{tpu_custom_call.1} parent=1 // pred_fallthru
      _
    // Predicated region
    $region14: #{tpu_custom_call.1} parent=1 // pred_check
      _
    $region15: #{tpu_custom_call.1} parent=1 // pred_check_branch
      %17 = sbr.rel (0) target = $region17
    $region16: #{tpu_custom_call.1} parent=1 // pred_region
      _
    $region17: #{tpu_custom_call.1} parent=1 // pred_fallthru
      _
    %v18 = vld [vmem:[%s0] sm:$0xff]
    %v19 = vld [vmem:[%s2] sm:$0xff]
    %v20 = vld [vmem:[%s1] sm:$0xff]
    %vm21 = vcmask 39936
    %v22 = vsel %vm21, %v18, -inf
    %23 = vmax.xlane.f32.xlu0 %v22
    %v24 = vpop.xlane.xlu0 %23
    %v25 = vsub.f32 %v18, %v24
    %v26 = vmul.f32 %v25, 1.442695
    %v27 = vpow.pop %v26
    %v28 = vsel %vm21, %v27, 0.0
    %29 = vadd.xlane.f32.xlu0 %v28
    %v30 = vpop.xlane.xlu0 %29
    %v31 = vlog2.pop %v30
    %v32 = vmul.f32 %v31, 0.6931472
    %v33 = vadd.f32 %v24, %v32
    %v34 = vlaneseq
    %v35 = vand.u32 %v34, 127
    %36 = vset.pattern.permute.xlu0 0
    %37 = vperm.xlu0 %36, %v20
    %v38 = vpop.permute.xlu0 %37
    %vm39 = vcmp.eq.s32.totalorder %v35, %v38
    %v40 = vsel %vm39, %v18, 0.0
    %v41 = vsel %vm21, %v40, 0.0
    %42 = vadd.xlane.f32.xlu0 %v41
    %v43 = vpop.xlane.xlu0 %42
    %v44 = vsub.f32 %v33, %v43
    %v45 = vld [vmem:[%s3] sm:$0xff]
    %vm46 = vcmask 490496
    %v47 = vsel %vm46, %v19, -inf
    %48 = vmax.xlane.f32.xlu0 %v47
    %v49 = vpop.xlane.xlu0 %48
    %v50 = vsub.f32 %v19, %v49
    %v51 = vmul.f32 %v50, 1.442695
    %v52 = vpow.pop %v51
    %v53 = vsel %vm46, %v52, 0.0
    %54 = vadd.xlane.f32.xlu0 %v53
    %v55 = vpop.xlane.xlu0 %54
    %v56 = vlog2.pop %v55
    %v57 = vmul.f32 %v56, 0.6931472
    %v58 = vadd.f32 %v49, %v57
    %59 = vset.pattern.permute.xlu0 0
    %60 = vperm.xlu0 %59, %v45
    %v61 = vpop.permute.xlu0 %60
    %vm62 = vcmp.eq.s32.totalorder %v35, %v61
    %v63 = vsel %vm62, %v19, 0.0
    %v64 = vsel %vm46, %v63, 0.0
    %65 = vadd.xlane.f32.xlu0 %v64
    %v66 = vpop.xlane.xlu0 %65
    %v67 = vsub.f32 %v58, %v66
    %v68 = vadd.f32 %v44, %v67
    %v69 = vlaneseq
    %v70 = vshrl.u32 %v69, 7
    %s71 = smul.u32 0, 8
    %v72 = vstv %s71
    %v73 = vadd.s32 %v72, %v70
    %vm74 = vcmp.lt.s32.totalorder %v73, 8
    %v75 = vsel %vm74, %v68, 0.0
    %v76 = vrot.slane %v75, 4
    %v77 = vadd.f32 %v75, %v76
    %v78 = vrot.slane %v77, 2
    %v79 = vadd.f32 %v77, %v78
    %v80 = vrot.slane %v79, 1
    %v81 = vadd.f32 %v79, %v80
    %v82 = vmul.f32 %v81, 0.125
    %vm83 = vcmask 0
    %84 = vst.msk [vmem:[#allocation2] sm:$0x1] %vm83, %v82
    // Predicated region
    $region18: #{tpu_custom_call.1} parent=1 // pred_check
      _
    $region19: #{tpu_custom_call.1} parent=1 // pred_check_branch
      %86 = sbr.rel (0) target = $region21
    $region20: #{tpu_custom_call.1} parent=1 // pred_region
      %88 = vsyncadd [#allocation3], 0
      %s90 = sshll.u32 [#allocation2], 4
      %s91 = int_to_ptr.vmem [resolvable:$true] %s90
      %s92 = sshll.u32 %s4, 4
      %s93 = int_to_ptr.hbm [resolvable:$true] %s92
      %95 = dma.vmem_to_hbm [thread:$0]  %s91, 16, %s93, [#allocation3]
    $region21: #{tpu_custom_call.1} parent=1 // pred_fallthru
      _
    // Predicated region
    $region22: #{tpu_custom_call.1} parent=1 // pred_check
      _
    $region23: #{tpu_custom_call.1} parent=1 // pred_check_branch
      %97 = sbr.rel (0) target = $region25
    $region24: #{tpu_custom_call.1} parent=1 // pred_region
      %99 = dma.done [#allocation3], 16
    $region25: #{tpu_custom_call.1} parent=1 // pred_fallthru
      _
    %100 = vsyncpa [#allocation3], 1

</llo_original>
